<compile_context>
chip_gen: v7x
topology: tpu7x:2x2x1
jax: 0.10.0
libtpu: 0.0.40
codegen_flags: <defaults>
</compile_context>

<pallas_src>
import jax
import jax.numpy as jnp
from jax.experimental import pallas as pl
from jax.experimental.pallas import tpu as pltpu

_H1, _H2 = 128, 64
_TB = 2048                      # default batch tile (rows)
_X_VMEM_BUDGET = 16 << 20       # bytes for the double-buffered x stream


def _mlp_kernel(x_ref, w1_ref, b1_ref, w2_ref, b2_ref, w3r_ref, b3_ref, o_ref):
    # layer 1: (tb, D) @ (D, 128) on MXU, f32 accumulation, + bias, ReLU
    h1 = jnp.dot(x_ref[...], w1_ref[...], preferred_element_type=jnp.float32)
    h1 = jnp.maximum(h1 + b1_ref[...], 0.0)
    # layer 2: (tb, 128) @ (128, 64) on MXU, f32 accumulation, + bias, ReLU
    h2 = jnp.dot(h1, w2_ref[...], preferred_element_type=jnp.float32)
    h2 = jnp.maximum(h2 + b2_ref[...], 0.0)
    # layer 3: contract the 64-dim of (1, 64) x (tb, 64) -> lane-dense (1, tb)
    h3 = jax.lax.dot_general(
        w3r_ref[...], h2,
        dimension_numbers=(((1,), (1,)), ((), ())),
        preferred_element_type=jnp.float32)
    o_ref[...] = (h3 + b3_ref[...]).astype(o_ref.dtype)


def regressor_forward(x, params, *, batch_tile=_TB):
    """x: (B, D) float32; params: weights stored (in, out), biases (1, out)."""
    B, D = x.shape
    w1, b1 = params["w1"], params["b1"]
    w2, b2 = params["w2"], params["b2"]
    w3, b3 = params["w3"], params["b3"]
    w3r = w3.T  # (1, 64) row for the lane-dense layer-3 contraction

    # Clamp the tile so the double-buffered f32 x stream fits a conservative
    # VMEM budget (v7x scoped default is 32 MiB; leave ample headroom).
    max_rows = max(128, (_X_VMEM_BUDGET // (2 * D * 4)) // 128 * 128)
    tb = min(batch_tile, max_rows)
    if B <= tb:
        tb = B                          # single full block: no grid overhead
    else:
        tb = max(128, (tb // 128) * 128)  # lane-dense out block needs %128==0
    n_tiles = pl.cdiv(B, tb)

    def resident(a):
        nd = a.ndim
        return pl.BlockSpec(a.shape, lambda i: (0,) * nd)

    flops = 2 * B * (D * _H1 + _H1 * _H2 + _H2)
    bytes_accessed = (
        x.size * 4
        + (w1.size + b1.size + w2.size + b2.size + w3r.size + b3.size) * 4
        + B * 4)

    out = pl.pallas_call(
        _mlp_kernel,
        out_shape=jax.ShapeDtypeStruct((1, B), jnp.float32),
        grid=(n_tiles,),
        in_specs=[
            pl.BlockSpec((tb, D), lambda i: (i, 0)),   # streamed over batch
            resident(w1), resident(b1),                # VMEM-resident weights
            resident(w2), resident(b2),
            resident(w3r), resident(b3),
        ],
        out_specs=pl.BlockSpec((1, tb), lambda i: (0, i)),  # lane-dense slab
        compiler_params=pltpu.CompilerParams(
            dimension_semantics=("parallel",)),
        cost_estimate=pl.CostEstimate(
            flops=flops, transcendentals=0, bytes_accessed=bytes_accessed),
    )(x, w1, b1, w2, b2, w3r, b3)
    return out.reshape(B, 1)


def init_params(key, input_dim):
    """torch.nn.Linear-style init (uniform +-1/sqrt(fan_in)); weights stored (in, out)."""
    dims = [(input_dim, _H1), (_H1, _H2), (_H2, 1)]
    params = {}
    keys = jax.random.split(key, 2 * len(dims))
    for i, (fan_in, fan_out) in enumerate(dims):
        bound = 1.0 / jnp.sqrt(jnp.float32(fan_in))
        params[f"w{i + 1}"] = jax.random.uniform(
            keys[2 * i], (fan_in, fan_out), minval=-bound, maxval=bound,
            dtype=jnp.float32)
        params[f"b{i + 1}"] = jax.random.uniform(
            keys[2 * i + 1], (1, fan_out), minval=-bound, maxval=bound,
            dtype=jnp.float32)
    return params


def _ref_forward(x, params):
    """Pure-JAX f32 reference matching the PyTorch module's forward."""
    h1 = jnp.maximum(x @ params["w1"] + params["b1"], 0.0)
    h2 = jnp.maximum(h1 @ params["w2"] + params["b2"], 0.0)
    return h2 @ params["w3"] + params["b3"]


if __name__ == "__main__":
    key = jax.random.PRNGKey(0)
    k_x, k_p, k_x2 = jax.random.split(key, 3)

    batch, input_dim = 8, 32
    x = jax.random.normal(k_x, (batch, input_dim), dtype=jnp.float32)
    params = init_params(k_p, input_dim)

    # Tiny-batch path (single full block, no grid overhead).
    out = regressor_forward(x, params)
    jax.block_until_ready(out)
    assert out.shape == (batch, 1)
    ref = _ref_forward(x, params)
    assert jnp.allclose(out, ref, atol=2e-2, rtol=2e-2)

    # Gridded + ragged-tail path: B=520, tile=256 -> grid=(3,), last block
    # masked (no jnp.pad copy of x).
    x2 = jax.random.normal(k_x2, (520, input_dim), dtype=jnp.float32)
    out2 = regressor_forward(x2, params, batch_tile=256)
    jax.block_until_ready(out2)
    assert out2.shape == (520, 1)
    ref2 = _ref_forward(x2, params)
    assert jnp.allclose(out2, ref2, atol=2e-2, rtol=2e-2)

    print("KERNEL_OK")
</pallas_src>

<mosaic_0001>
module attributes {stable_mosaic.version = 11 : i64} {
  func.func @_mlp_kernel(%arg0: i32, %arg1: memref<8x32xf32, #tpu.memory_space<vmem>>, %arg2: memref<32x128xf32, #tpu.memory_space<vmem>>, %arg3: memref<1x128xf32, #tpu.memory_space<vmem>>, %arg4: memref<128x64xf32, #tpu.memory_space<vmem>>, %arg5: memref<1x64xf32, #tpu.memory_space<vmem>>, %arg6: memref<1x64xf32, #tpu.memory_space<vmem>>, %arg7: memref<1x1xf32, #tpu.memory_space<vmem>>, %arg8: memref<1x8xf32, #tpu.memory_space<vmem>>) attributes {dimension_semantics = [#tpu.dimension_semantics<parallel>], iteration_bounds = array<i64: 1>, scalar_prefetch = 0 : i64, scratch_operands = 0 : i64, tpu.core_type = #tpu.core_type<tc>, window_params = [{transform_indices = @transform_0, window_bounds = array<i64: 8, 32>}, {pipeline_mode = #tpu.pipeline_mode<synchronous>, transform_indices = @transform_1, window_bounds = array<i64: 32, 128>}, {pipeline_mode = #tpu.pipeline_mode<synchronous>, transform_indices = @transform_2, window_bounds = array<i64: 1, 128>}, {pipeline_mode = #tpu.pipeline_mode<synchronous>, transform_indices = @transform_3, window_bounds = array<i64: 128, 64>}, {pipeline_mode = #tpu.pipeline_mode<synchronous>, transform_indices = @transform_4, window_bounds = array<i64: 1, 64>}, {pipeline_mode = #tpu.pipeline_mode<synchronous>, transform_indices = @transform_5, window_bounds = array<i64: 1, 64>}, {pipeline_mode = #tpu.pipeline_mode<synchronous>, transform_indices = @transform_6, window_bounds = array<i64: 1, 1>}, {transform_indices = @transform_7, window_bounds = array<i64: 1, 8>}]} {
    %c0 = arith.constant 0 : index
    %c0_0 = arith.constant 0 : index
    %0 = vector.load %arg1[%c0, %c0_0] : memref<8x32xf32, #tpu.memory_space<vmem>>, vector<8x32xf32>
    %c0_1 = arith.constant 0 : index
    %c0_2 = arith.constant 0 : index
    %1 = vector.load %arg2[%c0_1, %c0_2] : memref<32x128xf32, #tpu.memory_space<vmem>>, vector<32x128xf32>
    %cst = arith.constant dense<0.000000e+00> : vector<8x128xf32>
    %2 = tpu.matmul %0, %1, %cst {dimension_numbers = #tpu.dot_dimension_numbers<[1], [0], [0], [1], [0, 0, 1, 1], [], []>} : vector<8x32xf32>, vector<32x128xf32>, vector<8x128xf32> -> vector<8x128xf32>
    %c0_3 = arith.constant 0 : index
    %c0_4 = arith.constant 0 : index
    %3 = vector.load %arg3[%c0_3, %c0_4] : memref<1x128xf32, #tpu.memory_space<vmem>>, vector<1x128xf32>
    %4 = vector.broadcast %3 : vector<1x128xf32> to vector<8x128xf32>
    %5 = arith.addf %2, %4 : vector<8x128xf32>
    %cst_5 = arith.constant 0.000000e+00 : f32
    %6 = vector.broadcast %cst_5 : f32 to vector<8x128xf32>
    %7 = arith.maximumf %5, %6 : vector<8x128xf32>
    %c0_6 = arith.constant 0 : index
    %c0_7 = arith.constant 0 : index
    %8 = vector.load %arg4[%c0_6, %c0_7] : memref<128x64xf32, #tpu.memory_space<vmem>>, vector<128x64xf32>
    %cst_8 = arith.constant dense<0.000000e+00> : vector<8x64xf32>
    %9 = tpu.matmul %7, %8, %cst_8 {dimension_numbers = #tpu.dot_dimension_numbers<[1], [0], [0], [1], [0, 0, 1, 1], [], []>} : vector<8x128xf32>, vector<128x64xf32>, vector<8x64xf32> -> vector<8x64xf32>
    %c0_9 = arith.constant 0 : index
    %c0_10 = arith.constant 0 : index
    %10 = vector.load %arg5[%c0_9, %c0_10] : memref<1x64xf32, #tpu.memory_space<vmem>>, vector<1x64xf32>
    %11 = vector.broadcast %10 : vector<1x64xf32> to vector<8x64xf32>
    %12 = arith.addf %9, %11 : vector<8x64xf32>
    %cst_11 = arith.constant 0.000000e+00 : f32
    %13 = vector.broadcast %cst_11 : f32 to vector<8x64xf32>
    %14 = arith.maximumf %12, %13 : vector<8x64xf32>
    %c0_12 = arith.constant 0 : index
    %c0_13 = arith.constant 0 : index
    %15 = vector.load %arg6[%c0_12, %c0_13] : memref<1x64xf32, #tpu.memory_space<vmem>>, vector<1x64xf32>
    %cst_14 = arith.constant dense<0.000000e+00> : vector<1x8xf32>
    %16 = tpu.matmul %15, %14, %cst_14 {dimension_numbers = #tpu.dot_dimension_numbers<[1], [1], [0], [0], [0, 0, 1, 0], [], []>} : vector<1x64xf32>, vector<8x64xf32>, vector<1x8xf32> -> vector<1x8xf32>
    %c0_15 = arith.constant 0 : index
    %c0_16 = arith.constant 0 : index
    %17 = vector.load %arg7[%c0_15, %c0_16] : memref<1x1xf32, #tpu.memory_space<vmem>>, vector<1x1xf32>
    %18 = vector.broadcast %17 : vector<1x1xf32> to vector<1x8xf32>
    %19 = arith.addf %16, %18 : vector<1x8xf32>
    %c0_17 = arith.constant 0 : index
    %c0_18 = arith.constant 0 : index
    %20 = vector.load %arg8[%c0_17, %c0_18] : memref<1x8xf32, #tpu.memory_space<vmem>>, vector<1x8xf32>
    tpu.vector_store %arg8[%c0_17, %c0_18], %19 {strides = array<i32>} : memref<1x8xf32, #tpu.memory_space<vmem>>, vector<1x8xf32>,
    return
  }
  func.func @transform_0(%arg0: i32) -> (i32, i32) {
    %c0_i32 = arith.constant 0 : i32
    %c0_i32_0 = arith.constant 0 : i32
    return %arg0, %c0_i32 : i32, i32
  }
  func.func @transform_1(%arg0: i32) -> (i32, i32) {
    %c0_i32 = arith.constant 0 : i32
    %c0_i32_0 = arith.constant 0 : i32
    %c0_i32_1 = arith.constant 0 : i32
    return %c0_i32, %c0_i32_0 : i32, i32
  }
  func.func @transform_2(%arg0: i32) -> (i32, i32) {
    %c0_i32 = arith.constant 0 : i32
    %c0_i32_0 = arith.constant 0 : i32
    %c0_i32_1 = arith.constant 0 : i32
    return %c0_i32, %c0_i32_0 : i32, i32
  }
  func.func @transform_3(%arg0: i32) -> (i32, i32) {
    %c0_i32 = arith.constant 0 : i32
    %c0_i32_0 = arith.constant 0 : i32
    %c0_i32_1 = arith.constant 0 : i32
    return %c0_i32, %c0_i32_0 : i32, i32
  }
  func.func @transform_4(%arg0: i32) -> (i32, i32) {
    %c0_i32 = arith.constant 0 : i32
    %c0_i32_0 = arith.constant 0 : i32
    %c0_i32_1 = arith.constant 0 : i32
    return %c0_i32, %c0_i32_0 : i32, i32
  }
  func.func @transform_5(%arg0: i32) -> (i32, i32) {
    %c0_i32 = arith.constant 0 : i32
    %c0_i32_0 = arith.constant 0 : i32
    %c0_i32_1 = arith.constant 0 : i32
    return %c0_i32, %c0_i32_0 : i32, i32
  }
  func.func @transform_6(%arg0: i32) -> (i32, i32) {
    %c0_i32 = arith.constant 0 : i32
    %c0_i32_0 = arith.constant 0 : i32
    %c0_i32_1 = arith.constant 0 : i32
    return %c0_i32, %c0_i32_0 : i32, i32
  }
  func.func @transform_7(%arg0: i32) -> (i32, i32) {
    %c0_i32 = arith.constant 0 : i32
    %c0_i32_0 = arith.constant 0 : i32
    return %c0_i32, %arg0 : i32, i32
  }
}

</mosaic_0001>

<llo_original>
// kernel: tpu_custom_call.1
$region0: #{tpu_custom_call.1}
  #allocation0 [shape = 'u32[]', space=smem, size = 0x4, offset = 0x4, fixed_abs, tag = 'smem constant byte address 0x4 - core index']
  #allocation1 [shape = 'u32[144,128]{1,0:T(1,128)}', space=vmem, size = 0x12000, scoped, tag = 'internal scratch']
  #allocation2 [shape = 'f32[1,1]{1,0:T(1,128)S(1)}', space=vmem, size = 0x200, scoped, tag = 'scoped memory for tpu_custom_call.1']
  %s0 = inlined_call_operand.vmem [shape: f32[8,32], index: 0, kind: input, shape index: {}]
  %s1 = inlined_call_operand.vmem [shape: f32[32,128], index: 1, kind: input, shape index: {}]
  %s2 = inlined_call_operand.vmem [shape: f32[1,128], index: 2, kind: input, shape index: {}]
  %s3 = inlined_call_operand.vmem [shape: f32[128,64], index: 3, kind: input, shape index: {}]
  %s4 = inlined_call_operand.vmem [shape: f32[1,64], index: 4, kind: input, shape index: {}]
  %s5 = inlined_call_operand.vmem [shape: f32[1,64], index: 5, kind: input, shape index: {}]
  %s6 = inlined_call_operand.<no memory space> [shape: f32[1,1], index: 6, kind: input, shape index: {}]
  %s7 = inlined_call_operand.hbm [shape: f32[1,8], index: 7, kind: output, shape index: {}]
  %s8 = sld [smem:[#allocation0]]
  $region38: #{tpu_custom_call.1} parent=0
    _
  %s10 = ssub.s32 1, %s8
  %s11 = scalar_select 0, %s10, %s8
  %v12 = vstv %s6
  %13 = vst [vmem:[#allocation2] sm:$0x1] %v12
  $region1: #{tpu_custom_call.1} parent=0
    #allocation3 [shape = 'u8[512]{0}', space=vmem, size = 0x400, scoped, tag = 'output window, operand 0, single buffered']
    #allocation4 [shape = 's32[1]{0}', space=sflag, size = 0x4, scoped, tag = 'scoped memory for tpu_custom_call.1']
    %14 = vsyncpa [#allocation4], 0
    // Predicated region
    $region2: #{tpu_custom_call.1} parent=1 // pred_check
      _
    $region3: #{tpu_custom_call.1} parent=1 // pred_check_branch
      %16 = sbr.rel (0) target = $region5
    $region4: #{tpu_custom_call.1} parent=1 // pred_region
      _
    $region5: #{tpu_custom_call.1} parent=1 // pred_fallthru
      _
    // Predicated region
    $region6: #{tpu_custom_call.1} parent=1 // pred_check
      _
    $region7: #{tpu_custom_call.1} parent=1 // pred_check_branch
      %18 = sbr.rel (0) target = $region9
    $region8: #{tpu_custom_call.1} parent=1 // pred_region
      _
    $region9: #{tpu_custom_call.1} parent=1 // pred_fallthru
      _
    // Predicated region
    $region10: #{tpu_custom_call.1} parent=1 // pred_check
      _
    $region11: #{tpu_custom_call.1} parent=1 // pred_check_branch
      %20 = sbr.rel (0) target = $region13
    $region12: #{tpu_custom_call.1} parent=1 // pred_region
      _
    $region13: #{tpu_custom_call.1} parent=1 // pred_fallthru
      _
    // Predicated region
    $region14: #{tpu_custom_call.1} parent=1 // pred_check
      _
    $region15: #{tpu_custom_call.1} parent=1 // pred_check_branch
      %22 = sbr.rel (0) target = $region17
    $region16: #{tpu_custom_call.1} parent=1 // pred_region
      _
    $region17: #{tpu_custom_call.1} parent=1 // pred_fallthru
      _
    // Predicated region
    $region18: #{tpu_custom_call.1} parent=1 // pred_check
      _
    $region19: #{tpu_custom_call.1} parent=1 // pred_check_branch
      %24 = sbr.rel (0) target = $region21
    $region20: #{tpu_custom_call.1} parent=1 // pred_region
      _
    $region21: #{tpu_custom_call.1} parent=1 // pred_fallthru
      _
    // Predicated region
    $region22: #{tpu_custom_call.1} parent=1 // pred_check
      _
    $region23: #{tpu_custom_call.1} parent=1 // pred_check_branch
      %26 = sbr.rel (0) target = $region25
    $region24: #{tpu_custom_call.1} parent=1 // pred_region
      _
    $region25: #{tpu_custom_call.1} parent=1 // pred_fallthru
      _
    // Predicated region
    $region26: #{tpu_custom_call.1} parent=1 // pred_check
      _
    $region27: #{tpu_custom_call.1} parent=1 // pred_check_branch
      %28 = sbr.rel (0) target = $region29
    $region28: #{tpu_custom_call.1} parent=1 // pred_region
      _
    $region29: #{tpu_custom_call.1} parent=1 // pred_fallthru
      _
    %v29 = vld [vmem:[%s0] sm:$0xff]
    %v30 = vld [vmem:[%s1] sm:$0xff]
    %v31 = vld [vmem:[%s1 + $0x8] sm:$0xff]
    %v32 = vld [vmem:[%s1 + $0x10] sm:$0xff]
    %v33 = vld [vmem:[%s1 + $0x18] sm:$0xff]
    %v34 = vld [vmem:[%s2] sm:$0x1]
    %v36 = vlaneseq
    %v37 = vshrl.u32 %v36, 7
    %v38 = vsub.s32 0, %v37
    %v39 = vrot.slane %v34, %v38
    %vm41 = vcmask 261120
    %v43 = vsel %vm41, %v29, 0
    %45 = vmatprep.subr.mxu0 0.0
    %46 = vmatpush1.msra.mxu0 %v30
    %47 = vmatprep.subr.mxu0 0.0
    %48 = vmatpush1.msra.mxu0 %v31
    %49 = vmatprep.subr.mxu0 0.0
    %50 = vmatpush1.msra.mxu0 %v32
    %51 = vmatprep.subr.mxu0 0.0
    %52 = vmatpush1.msra.mxu0 %v33
    %53 = vmatprep.subr.mxu0 0.0
    %54 = vmatpush1.msra.mxu0 0.0
    %55 = vmatprep.subr.mxu0 0.0
    %56 = vmatpush1.msra.mxu0 0.0
    %57 = vmatprep.subr.mxu0 0.0
    %58 = vmatpush1.msra.mxu0 0.0
    %59 = vmatprep.subr.mxu0 0.0
    %60 = vmatpush1.msra.mxu0 0.0
    %61 = vmatprep.subr.mxu0 0.0
    %62 = vmatpush1.msra.mxu0 0.0
    %63 = vmatprep.subr.mxu0 0.0
    %64 = vmatpush1.msra.mxu0 0.0
    %65 = vmatprep.subr.mxu0 0.0
    %66 = vmatpush1.msra.mxu0 0.0
    %67 = vmatprep.subr.mxu0 0.0
    %68 = vmatpush1.msra.mxu0 0.0
    %69 = vmatprep.subr.mxu0 0.0
    %70 = vmatpush1.msra.mxu0 0.0
    %71 = vmatprep.subr.mxu0 0.0
    %72 = vmatpush1.msra.mxu0 0.0
    %73 = vmatprep.subr.mxu0 0.0
    %74 = vmatpush1.msra.mxu0 0.0
    %75 = vmatprep.subr.mxu0 0.0
    %76 = vmatpush1.msra.mxu0 0.0
    %77 = vmatprep.subr.mxu0 0.0
    %78 = vmatpush1.msra.mxu0 0.0
    %79 = vmatprep.subr.mxu0 0.0
    %80 = vmatpush1.msra.mxu0 0.0
    %81 = vmatprep.subr.mxu0 0.0
    %82 = vmatpush1.msra.mxu0 0.0
    %83 = vmatprep.subr.mxu0 0.0
    %84 = vmatpush1.msra.mxu0 0.0
    %85 = vmatprep.subr.mxu0 0.0
    %86 = vmatpush1.msra.mxu0 0.0
    %87 = vmatprep.subr.mxu0 0.0
    %88 = vmatpush1.msra.mxu0 0.0
    %89 = vmatprep.subr.mxu0 0.0
    %90 = vmatpush1.msra.mxu0 0.0
    %91 = vmatprep.subr.mxu0 0.0
    %92 = vmatpush1.msra.mxu0 0.0
    %93 = vmatprep.subr.mxu0 0.0
    %94 = vmatpush1.msra.mxu0 0.0
    %95 = vmatprep.subr.mxu0 0.0
    %96 = vmatpush1.msra.mxu0 0.0
    %97 = vmatprep.subr.mxu0 0.0
    %98 = vmatpush1.msra.mxu0 0.0
    %99 = vmatprep.subr.mxu0 0.0
    %100 = vmatpush1.msra.mxu0 0.0
    %101 = vmatprep.subr.mxu0 0.0
    %102 = vmatpush1.msra.mxu0 0.0
    %103 = vmatprep.subr.mxu0 0.0
    %104 = vmatpush1.msra.mxu0 0.0
    %105 = vmatprep.subr.mxu0 0.0
    %106 = vmatpush1.msra.mxu0 0.0
    %107 = vmatprep.subr.mxu0 0.0
    %108 = vmatpush1.msra.mxu0 0.0
    %109 = vmatprep.mubr.f32.mxu0 0.0
    %110 = vmatmul.mubr.f32.gmra.mrb[0].mxu0 %v43
    %v111 = vpop.f32.mrb[0].mxu0
    %v112 = vadd.f32 %v39, %v111
    %v113 = vpop.f32.mrb[0].mxu0
    %114 = vdwg.mxu0
    %v115 = vmax.f32 %v112, 0.0
    %v116 = vld [vmem:[%s3] sm:$0xff]
    %v117 = vld [vmem:[%s3 + $0x8] sm:$0xff]
    %v118 = vld [vmem:[%s3 + $0x10] sm:$0xff]
    %v119 = vld [vmem:[%s3 + $0x18] sm:$0xff]
    %v120 = vld [vmem:[%s3 + $0x20] sm:$0xff]
    %v121 = vld [vmem:[%s3 + $0x28] sm:$0xff]
    %v122 = vld [vmem:[%s3 + $0x30] sm:$0xff]
    %v123 = vld [vmem:[%s3 + $0x38] sm:$0xff]
    %v124 = vld [vmem:[%s3 + $0x40] sm:$0xff]
    %v125 = vld [vmem:[%s3 + $0x48] sm:$0xff]
    %v126 = vld [vmem:[%s3 + $0x50] sm:$0xff]
    %v127 = vld [vmem:[%s3 + $0x58] sm:$0xff]
    %v128 = vld [vmem:[%s3 + $0x60] sm:$0xff]
    %v129 = vld [vmem:[%s3 + $0x68] sm:$0xff]
    %v130 = vld [vmem:[%s3 + $0x70] sm:$0xff]
    %v131 = vld [vmem:[%s3 + $0x78] sm:$0xff]
    %v132 = vld [vmem:[%s4] sm:$0x1]
    %v134 = vlaneseq
    %v135 = vshrl.u32 %v134, 7
    %v136 = vsub.s32 0, %v135
    %v137 = vrot.slane %v132, %v136
    %139 = vmatprep.subr.mxu0 0.0
    %140 = vmatpush1.msra.mxu0 %v116
    %141 = vmatprep.subr.mxu0 0.0
    %142 = vmatpush1.msra.mxu0 %v117
    %143 = vmatprep.subr.mxu0 0.0
    %144 = vmatpush1.msra.mxu0 %v118
    %145 = vmatprep.subr.mxu0 0.0
    %146 = vmatpush1.msra.mxu0 %v119
    %147 = vmatprep.subr.mxu0 0.0
    %148 = vmatpush1.msra.mxu0 %v120
    %149 = vmatprep.subr.mxu0 0.0
    %150 = vmatpush1.msra.mxu0 %v121
    %151 = vmatprep.subr.mxu0 0.0
    %152 = vmatpush1.msra.mxu0 %v122
    %153 = vmatprep.subr.mxu0 0.0
    %154 = vmatpush1.msra.mxu0 %v123
    %155 = vmatprep.subr.mxu0 0.0
    %156 = vmatpush1.msra.mxu0 %v124
    %157 = vmatprep.subr.mxu0 0.0
    %158 = vmatpush1.msra.mxu0 %v125
    %159 = vmatprep.subr.mxu0 0.0
    %160 = vmatpush1.msra.mxu0 %v126
    %161 = vmatprep.subr.mxu0 0.0
    %162 = vmatpush1.msra.mxu0 %v127
    %163 = vmatprep.subr.mxu0 0.0
    %164 = vmatpush1.msra.mxu0 %v128
    %165 = vmatprep.subr.mxu0 0.0
    %166 = vmatpush1.msra.mxu0 %v129
    %167 = vmatprep.subr.mxu0 0.0
    %168 = vmatpush1.msra.mxu0 %v130
    %169 = vmatprep.subr.mxu0 0.0
    %170 = vmatpush1.msra.mxu0 %v131
    %171 = vmatprep.subr.mxu0 0.0
    %172 = vmatpush1.msra.mxu0 0.0
    %173 = vmatprep.subr.mxu0 0.0
    %174 = vmatpush1.msra.mxu0 0.0
    %175 = vmatprep.subr.mxu0 0.0
    %176 = vmatpush1.msra.mxu0 0.0
    %177 = vmatprep.subr.mxu0 0.0
    %178 = vmatpush1.msra.mxu0 0.0
    %179 = vmatprep.subr.mxu0 0.0
    %180 = vmatpush1.msra.mxu0 0.0
    %181 = vmatprep.subr.mxu0 0.0
    %182 = vmatpush1.msra.mxu0 0.0
    %183 = vmatprep.subr.mxu0 0.0
    %184 = vmatpush1.msra.mxu0 0.0
    %185 = vmatprep.subr.mxu0 0.0
    %186 = vmatpush1.msra.mxu0 0.0
    %187 = vmatprep.subr.mxu0 0.0
    %188 = vmatpush1.msra.mxu0 0.0
    %189 = vmatprep.subr.mxu0 0.0
    %190 = vmatpush1.msra.mxu0 0.0
    %191 = vmatprep.subr.mxu0 0.0
    %192 = vmatpush1.msra.mxu0 0.0
    %193 = vmatprep.subr.mxu0 0.0
    %194 = vmatpush1.msra.mxu0 0.0
    %195 = vmatprep.subr.mxu0 0.0
    %196 = vmatpush1.msra.mxu0 0.0
    %197 = vmatprep.subr.mxu0 0.0
    %198 = vmatpush1.msra.mxu0 0.0
    %199 = vmatprep.subr.mxu0 0.0
    %200 = vmatpush1.msra.mxu0 0.0
    %201 = vmatprep.subr.mxu0 0.0
    %202 = vmatpush1.msra.mxu0 0.0
    %203 = vmatprep.mubr.f32.mxu0 0.0
    %204 = vmatmul.mubr.f32.gmra.mrb[0].mxu0 %v115
    %v205 = vpop.f32.mrb[0].mxu0
    %v206 = vadd.f32 %v137, %v205
    %v207 = vpop.f32.mrb[0].mxu0
    %208 = vdwg.mxu0
    %v209 = vmax.f32 %v206, 0.0
    %v210 = vld [vmem:[%s5] sm:$0x1]
    %v211 = vld [vmem:[#allocation2] sm:$0x1]
    %213 = vset.pattern.permute.xlu0 0
    %214 = vperm.xlu0 %213, %v211
    %v215 = vpop.permute.xlu0 %214
    %v217 = vlaneseq
    %v218 = vshrl.u32 %v217, 7
    %v219 = vsub.s32 0, %v218
    %v220 = vrot.slane %v215, %v219
    %vm221 = vcmask 523264
    %v223 = vsel %vm221, %v210, 0
    %v226 = vsel %vm221, %v209, 0
    %228 = vmatprep.subr.mxu0 0.0
    %229 = vmatpush1.xpose.msra.mxu0 %v226
    %230 = vmatprep.subr.mxu0 0.0
    %231 = vmatpush1.xpose.msra.mxu0 0.0
    %232 = vmatprep.subr.mxu0 0.0
    %233 = vmatpush1.xpose.msra.mxu0 0.0
    %234 = vmatprep.subr.mxu0 0.0
    %235 = vmatpush1.xpose.msra.mxu0 0.0
    %236 = vmatprep.subr.mxu0 0.0
    %237 = vmatpush1.xpose.msra.mxu0 0.0
    %238 = vmatprep.subr.mxu0 0.0
    %239 = vmatpush1.xpose.msra.mxu0 0.0
    %240 = vmatprep.subr.mxu0 0.0
    %241 = vmatpush1.xpose.msra.mxu0 0.0
    %242 = vmatprep.subr.mxu0 0.0
    %243 = vmatpush1.xpose.msra.mxu0 0.0
    %244 = vmatprep.subr.mxu0 0.0
    %245 = vmatpush1.xpose.msra.mxu0 0.0
    %246 = vmatprep.subr.mxu0 0.0
    %247 = vmatpush1.xpose.msra.mxu0 0.0
    %248 = vmatprep.subr.mxu0 0.0
    %249 = vmatpush1.xpose.msra.mxu0 0.0
    %250 = vmatprep.subr.mxu0 0.0
    %251 = vmatpush1.xpose.msra.mxu0 0.0
    %252 = vmatprep.subr.mxu0 0.0
    %253 = vmatpush1.xpose.msra.mxu0 0.0
    %254 = vmatprep.subr.mxu0 0.0
    %255 = vmatpush1.xpose.msra.mxu0 0.0
    %256 = vmatprep.subr.mxu0 0.0
    %257 = vmatpush1.xpose.msra.mxu0 0.0
    %258 = vmatprep.subr.mxu0 0.0
    %259 = vmatpush1.xpose.msra.mxu0 0.0
    %260 = vmatprep.subr.mxu0 0.0
    %261 = vmatpush1.xpose.msra.mxu0 0.0
    %262 = vmatprep.subr.mxu0 0.0
    %263 = vmatpush1.xpose.msra.mxu0 0.0
    %264 = vmatprep.subr.mxu0 0.0
    %265 = vmatpush1.xpose.msra.mxu0 0.0
    %266 = vmatprep.subr.mxu0 0.0
    %267 = vmatpush1.xpose.msra.mxu0 0.0
    %268 = vmatprep.subr.mxu0 0.0
    %269 = vmatpush1.xpose.msra.mxu0 0.0
    %270 = vmatprep.subr.mxu0 0.0
    %271 = vmatpush1.xpose.msra.mxu0 0.0
    %272 = vmatprep.subr.mxu0 0.0
    %273 = vmatpush1.xpose.msra.mxu0 0.0
    %274 = vmatprep.subr.mxu0 0.0
    %275 = vmatpush1.xpose.msra.mxu0 0.0
    %276 = vmatprep.subr.mxu0 0.0
    %277 = vmatpush1.xpose.msra.mxu0 0.0
    %278 = vmatprep.subr.mxu0 0.0
    %279 = vmatpush1.xpose.msra.mxu0 0.0
    %280 = vmatprep.subr.mxu0 0.0
    %281 = vmatpush1.xpose.msra.mxu0 0.0
    %282 = vmatprep.subr.mxu0 0.0
    %283 = vmatpush1.xpose.msra.mxu0 0.0
    %284 = vmatprep.subr.mxu0 0.0
    %285 = vmatpush1.xpose.msra.mxu0 0.0
    %286 = vmatprep.subr.mxu0 0.0
    %287 = vmatpush1.xpose.msra.mxu0 0.0
    %288 = vmatprep.subr.mxu0 0.0
    %289 = vmatpush1.xpose.msra.mxu0 0.0
    %290 = vmatprep.subr.mxu0 0.0
    %291 = vmatpush1.xpose.msra.mxu0 0.0
    %292 = vmatprep.mubr.f32.mxu0 0.0
    %293 = vmatmul.mubr.f32.gmra.mrb[0].mxu0 %v223
    %v294 = vpop.f32.mrb[0].mxu0
    %v295 = vadd.f32 %v220, %v294
    %v296 = vpop.f32.mrb[0].mxu0
    %297 = vdwg.mxu0
    %vm298 = vcmask 57344
    %299 = vst.msk [vmem:[#allocation3] sm:$0x1] %vm298, %v295
    // Predicated region
    $region30: #{tpu_custom_call.1} parent=1 // pred_check
      _
    $region31: #{tpu_custom_call.1} parent=1 // pred_check_branch
      %301 = sbr.rel (0) target = $region33
    $region32: #{tpu_custom_call.1} parent=1 // pred_region
      %s303 = ssub.s32 16, 16
      %304 = vsyncadd [#allocation4], %s303
      %s306 = sshll.u32 [#allocation3], 4
      %s307 = int_to_ptr.vmem [resolvable:$true] %s306
      %309 = dma.vmem_to_hbm [thread:$0]  %s307, 16, %s7, [#allocation4]
    $region33: #{tpu_custom_call.1} parent=1 // pred_fallthru
      _
    // Predicated region
    $region34: #{tpu_custom_call.1} parent=1 // pred_check
      _
    $region35: #{tpu_custom_call.1} parent=1 // pred_check_branch
      %311 = sbr.rel (0) target = $region37
    $region36: #{tpu_custom_call.1} parent=1 // pred_region
      %312 = dma.done [#allocation4], 16
    $region37: #{tpu_custom_call.1} parent=1 // pred_fallthru
      _
    %313 = vsyncpa [#allocation4], 1

</llo_original>
